<compile_context>
chip_gen: v5e
topology: v5e:2x2
jax: 0.10.0
libtpu: 0.0.40
codegen_flags: <defaults>
</compile_context>

<pallas_src>
import jax
import jax.numpy as jnp
from jax import lax
from jax.experimental import pallas as pl
from jax.experimental.pallas import tpu as pltpu

NUM_TYPES = 118   # PyTorch one_hot num_classes / Linear in-features
NUM_CORE_SPLITS = 2  # leading "parallel" grid axis (v7x megacore); free on 1-TC chips


def _round_up(x, m):
    return (x + m - 1) // m * m


def linear_ref_energy_kernel(seg_ref, w_ref, out_ref, iota_ref):
    # seg_ref:  [1, block_n] int32  per-atom graph ids (padding -> g_pad sentinel)
    # w_ref:    [1, block_n] f32    per-atom reference weights (padding -> 0.0)
    # out_ref:  [g_pad, 1]   f32    per-graph energy accumulator (VMEM-resident)
    # iota_ref: [g_pad, block_n] int32 scratch: grid-invariant graph-index plane
    step = pl.program_id(1)

    @pl.when(step == 0)
    def _():
        out_ref[...] = jnp.zeros_like(out_ref)
        # Hoisted once per core: row g of the plane holds the constant g.
        iota_ref[...] = lax.broadcasted_iota(jnp.int32, iota_ref.shape, 0)

    # Masked multiply-accumulate (VPU select + XLU lane reduction):
    #   contrib[g, n] = w_atom[n] if atom n belongs to graph g else 0
    contrib = jnp.where(seg_ref[...] == iota_ref[...], w_ref[...], 0.0)
    out_ref[...] += jnp.sum(contrib, axis=-1, keepdims=True)


def linear_reference_energy(atom_types, n_node, weight, *, block_n=2048,
                            num_core_splits=NUM_CORE_SPLITS):
    """Pallas LinearReferenceEnergy.forward: returns [num_graphs] f32."""
    n_atoms = atom_types.shape[0]
    num_graphs = n_node.shape[0]

    # Input-contract check (only when values are concrete; under jit the
    # caller must guarantee sum(n_node) == n_atoms and atom_types in [0, 118)).
    try:
        total = int(jax.device_get(jnp.sum(n_node)))
    except Exception:  # traced / abstract values
        total = None
    if total is not None and total != n_atoms:
        raise ValueError(f"sum(n_node)={total} must equal n_atoms={n_atoms}")

    n_pad = _round_up(max(n_atoms, 1), num_core_splits * block_n)
    g_pad = _round_up(max(num_graphs, 1), 8)

    # Glue (plain JAX): per-atom graph ids from n_node counts.
    seg_ids = jnp.repeat(
        jnp.arange(num_graphs, dtype=jnp.int32), n_node, total_repeat_length=n_atoms
    )
    # Glue (plain JAX): gather the 118-entry weight table per atom.
    w_vec = jnp.asarray(weight, jnp.float32).reshape(NUM_TYPES)
    w_atom = w_vec[atom_types]

    # Pad the node axis.  Padding atoms get graph id g_pad (matches no
    # accumulator row) and weight 0.0, so they contribute exactly zero.
    seg_pad = jnp.full((n_pad,), g_pad, dtype=jnp.int32)
    seg_pad = seg_pad.at[:n_atoms].set(seg_ids)
    w_pad = jnp.zeros((n_pad,), jnp.float32)
    w_pad = w_pad.at[:n_atoms].set(w_atom)

    # Lane-major rows: 4 B per atom of DMA each, double-buffered per block.
    seg_2d = seg_pad.reshape(1, n_pad)
    w_2d = w_pad.reshape(1, n_pad)

    steps_per_core = n_pad // (num_core_splits * block_n)
    grid = (num_core_splits, steps_per_core)

    def node_block(c, i):
        return (0, c * steps_per_core + i)

    out = pl.pallas_call(
        linear_ref_energy_kernel,
        out_shape=jax.ShapeDtypeStruct((num_core_splits, g_pad, 1), jnp.float32),
        grid_spec=pltpu.PrefetchScalarGridSpec(
            num_scalar_prefetch=0,
            grid=grid,
            in_specs=[
                pl.BlockSpec((1, block_n), node_block),   # graph ids
                pl.BlockSpec((1, block_n), node_block),   # per-atom weights
            ],
            # Per-core output slab; constant index along the reduction axis ->
            # VMEM-resident accumulator, written back once per core.
            out_specs=pl.BlockSpec((None, g_pad, 1), lambda c, i: (c, 0, 0)),
            scratch_shapes=[pltpu.VMEM((g_pad, block_n), jnp.int32)],
        ),
        compiler_params=pltpu.CompilerParams(
            dimension_semantics=("parallel", "arbitrary"),
        ),
    )(seg_2d, w_2d)

    # Combine the per-core partial sums and drop graph padding.
    return jnp.sum(out, axis=0)[:num_graphs, 0]


def reference_forward(atom_types, n_node, weight):
    """Pure-JAX reference (mirrors the PyTorch module)."""
    num_graphs = n_node.shape[0]
    one_hot = jax.nn.one_hot(atom_types, NUM_TYPES, dtype=jnp.float32)
    seg_ids = jnp.repeat(
        jnp.arange(num_graphs), n_node, total_repeat_length=atom_types.shape[0]
    )
    reduced = jax.ops.segment_sum(one_hot, seg_ids, num_segments=num_graphs)
    return reduced @ jnp.asarray(weight, jnp.float32).reshape(NUM_TYPES)


if __name__ == "__main__":
    # Small shapes consistent with the module: 300 atoms, 3 graphs,
    # Linear weight of shape [1, 118] (PyTorch Linear(118, 1, bias=False)).
    n_atoms = 300
    n_node = jnp.array([100, 80, 120], dtype=jnp.int32)

    key = jax.random.PRNGKey(0)
    k_types, k_w = jax.random.split(key)
    atom_types = jax.random.randint(k_types, (n_atoms,), 0, NUM_TYPES, dtype=jnp.int32)
    weight = 0.1 * jax.random.normal(k_w, (1, NUM_TYPES), jnp.float32)

    pred = linear_reference_energy(atom_types, n_node, weight)
    pred = jax.block_until_ready(pred)

    ref = reference_forward(atom_types, n_node, weight)
    assert pred.shape == (3,)
    assert jnp.allclose(pred, ref, atol=1e-4, rtol=1e-4), (pred, ref)

    print("KERNEL_OK")
</pallas_src>

<mosaic_0001>
module attributes {stable_mosaic.version = 11 : i64} {
  func.func @linear_ref_energy_kernel(%arg0: i32, %arg1: i32, %arg2: memref<1x2048xi32, #tpu.memory_space<vmem>>, %arg3: memref<1x2048xf32, #tpu.memory_space<vmem>>, %arg4: memref<1x8x1xf32, #tpu.memory_space<vmem>>, %arg5: memref<8x2048xi32, #tpu.memory_space<vmem>>) attributes {dimension_semantics = [#tpu.dimension_semantics<parallel>, #tpu.dimension_semantics<arbitrary>], iteration_bounds = array<i64: 2, 1>, scalar_prefetch = 0 : i64, scratch_operands = 1 : i64, tpu.core_type = #tpu.core_type<tc>, window_params = [{transform_indices = @transform_0, window_bounds = array<i64: 1, 2048>}, {transform_indices = @transform_1, window_bounds = array<i64: 1, 2048>}, {transform_indices = @transform_2, window_bounds = array<i64: 1, 8, 1>}]} {
    %c0_i32 = arith.constant 0 : i32
    %0 = arith.cmpi eq, %arg1, %c0_i32 : i32
    %1 = arith.extui %0 : i1 to i32
    %c0_i32_0 = arith.constant 0 : i32
    %2 = arith.cmpi ne, %1, %c0_i32_0 : i32
    scf.if %2 {
      %cst_13 = arith.constant 0.000000e+00 : f32
      %20 = vector.broadcast %cst_13 : f32 to vector<8x1xf32>
      %c0_14 = arith.constant 0 : index
      %c0_15 = arith.constant 0 : index
      %c0_16 = arith.constant 0 : index
      %21 = vector.load %arg4[%c0_14, %c0_15, %c0_16] : memref<1x8x1xf32, #tpu.memory_space<vmem>>, vector<1x8x1xf32>
      %22 = vector.shape_cast %21 : vector<1x8x1xf32> to vector<8x1xf32>
      %23 = vector.shape_cast %20 : vector<8x1xf32> to vector<1x8x1xf32>
      tpu.vector_store %arg4[%c0_14, %c0_15, %c0_16], %23 {strides = array<i32>} : memref<1x8x1xf32, #tpu.memory_space<vmem>>, vector<1x8x1xf32>,
      %24 = tpu.iota {dimensions = array<i32: 0>} : vector<8x2048xi32>
      %c0_17 = arith.constant 0 : index
      %c0_18 = arith.constant 0 : index
      %25 = vector.load %arg5[%c0_17, %c0_18] : memref<8x2048xi32, #tpu.memory_space<vmem>>, vector<8x2048xi32>
      tpu.vector_store %arg5[%c0_17, %c0_18], %24 {strides = array<i32>} : memref<8x2048xi32, #tpu.memory_space<vmem>>, vector<8x2048xi32>,
    } else {
    }
    %c0 = arith.constant 0 : index
    %c0_1 = arith.constant 0 : index
    %3 = vector.load %arg2[%c0, %c0_1] : memref<1x2048xi32, #tpu.memory_space<vmem>>, vector<1x2048xi32>
    %c0_2 = arith.constant 0 : index
    %c0_3 = arith.constant 0 : index
    %4 = vector.load %arg5[%c0_2, %c0_3] : memref<8x2048xi32, #tpu.memory_space<vmem>>, vector<8x2048xi32>
    %5 = vector.broadcast %3 : vector<1x2048xi32> to vector<8x2048xi32>
    %6 = arith.cmpi eq, %5, %4 : vector<8x2048xi32>
    %c0_4 = arith.constant 0 : index
    %c0_5 = arith.constant 0 : index
    %7 = vector.load %arg3[%c0_4, %c0_5] : memref<1x2048xf32, #tpu.memory_space<vmem>>, vector<1x2048xf32>
    %cst = arith.constant 0.000000e+00 : f32
    %8 = vector.shape_cast %7 : vector<1x2048xf32> to vector<1x2048xf32>
    %9 = vector.broadcast %8 : vector<1x2048xf32> to vector<8x2048xf32>
    %10 = vector.broadcast %cst : f32 to vector<8x2048xf32>
    %11 = arith.select %6, %9, %10 : vector<8x2048xi1>, vector<8x2048xf32>
    %c0_6 = arith.constant 0 : index
    %c0_7 = arith.constant 0 : index
    %c0_8 = arith.constant 0 : index
    %12 = vector.load %arg4[%c0_6, %c0_7, %c0_8] : memref<1x8x1xf32, #tpu.memory_space<vmem>>, vector<1x8x1xf32>
    %13 = vector.shape_cast %12 : vector<1x8x1xf32> to vector<8x1xf32>
    %cst_9 = arith.constant dense<0.000000e+00> : vector<8xf32>
    %14 = vector.multi_reduction <add>, %11, %cst_9 [1] : vector<8x2048xf32> to vector<8xf32>
    %15 = vector.shape_cast %14 : vector<8xf32> to vector<8x1xf32>
    %16 = arith.addf %13, %15 : vector<8x1xf32>
    %c0_10 = arith.constant 0 : index
    %c0_11 = arith.constant 0 : index
    %c0_12 = arith.constant 0 : index
    %17 = vector.load %arg4[%c0_10, %c0_11, %c0_12] : memref<1x8x1xf32, #tpu.memory_space<vmem>>, vector<1x8x1xf32>
    %18 = vector.shape_cast %17 : vector<1x8x1xf32> to vector<8x1xf32>
    %19 = vector.shape_cast %16 : vector<8x1xf32> to vector<1x8x1xf32>
    tpu.vector_store %arg4[%c0_10, %c0_11, %c0_12], %19 {strides = array<i32>} : memref<1x8x1xf32, #tpu.memory_space<vmem>>, vector<1x8x1xf32>,
    return
  }
  func.func @transform_0(%arg0: i32, %arg1: i32) -> (i32, i32) {
    %c1_i32 = arith.constant 1 : i32
    %0 = arith.muli %arg0, %c1_i32 : i32
    %1 = arith.addi %0, %arg1 : i32
    %c0_i32 = arith.constant 0 : i32
    %c0_i32_0 = arith.constant 0 : i32
    return %c0_i32, %1 : i32, i32
  }
  func.func @transform_1(%arg0: i32, %arg1: i32) -> (i32, i32) {
    %c1_i32 = arith.constant 1 : i32
    %0 = arith.muli %arg0, %c1_i32 : i32
    %1 = arith.addi %0, %arg1 : i32
    %c0_i32 = arith.constant 0 : i32
    %c0_i32_0 = arith.constant 0 : i32
    return %c0_i32, %1 : i32, i32
  }
  func.func @transform_2(%arg0: i32, %arg1: i32) -> (i32, i32, i32) {
    %c0_i32 = arith.constant 0 : i32
    %c0_i32_0 = arith.constant 0 : i32
    %c0_i32_1 = arith.constant 0 : i32
    return %arg0, %c0_i32, %c0_i32_0 : i32, i32, i32
  }
}

</mosaic_0001>

<llo_original>
// kernel: tpu_custom_call.1
$region0: #{tpu_custom_call.1}
  #allocation0 [shape = 'u32[]', space=smem, size = 0x4, offset = 0x4, fixed_abs, tag = 'smem constant byte address 0x4 - core index']
  #allocation1 [shape = 'u32[72,128]{1,0:T(1,128)}', space=vmem, size = 0x9000, scoped, tag = 'internal scratch']
  #allocation2 [shape = 's32[8,2048]{1,0:T(8,128)}', space=vmem, size = 0x10000, scoped, tag = 'scratch operand']
  %s0 = inlined_call_operand.hbm [shape: s32[1,4096], index: 0, kind: input, shape index: {}]
  %s1 = inlined_call_operand.hbm [shape: f32[1,4096], index: 1, kind: input, shape index: {}]
  %s2 = inlined_call_operand.vmem [shape: f32[2,8,1], index: 2, kind: output, shape index: {}]
  %s3 = sld [smem:[#allocation0]]
  $region53: #{tpu_custom_call.1} parent=0
    _
  %s5 = ssub.s32 1, %s3
  %s6 = scalar_select 0, %s5, %s3
  $region1: #{tpu_custom_call.1} parent=0
    #allocation3 [shape = 'u8[16384]{0}', space=vmem, size = 0x4000, scoped, tag = 'input window, operand 0']
    #allocation4 [shape = 's32[2]{0}', space=sflag, size = 0x8, scoped, tag = 'scoped memory for tpu_custom_call.1']
    #allocation5 [shape = 'u8[16384]{0}', space=vmem, size = 0x4000, scoped, tag = 'input window, operand 1']
    #allocation6 [shape = 's32[2]{0}', space=sflag, size = 0x8, scoped, tag = 'scoped memory for tpu_custom_call.1']
    %7 = vsyncpa [#allocation4], 0
    %s8 = scalar_lea.sflag [#allocation4], 1
    %9 = vsyncpa %s8, 0
    %10 = vsyncpa [#allocation6], 0
    %s11 = scalar_lea.sflag [#allocation6], 1
    %12 = vsyncpa %s11, 0
    loop: start=0, step=1, limit=4
    $region2: #{tpu_custom_call.1} parent=1 // loop_pre_header
      _
    $region3: #{tpu_custom_call.1} parent=1 // loop_header
      %s14 = sphi 0, %s18
      %p15 = scmp.ge.s32.totalorder %s14, 4
      %s21 = sphi 0, %s33
      %s22 = sphi 0, %s29
      %s23 = sphi 0, %s21
      %s24 = sphi 0, %s22
      %s25 = sphi 0, %s23
      %s26 = sphi 0, %s24
      %s38 = sphi 0, %s40
      %s41 = sphi 0, %s38
      %s42 = sphi 0, %s41
      %s58 = sphi 0, %s42
      %s66 = sphi 0, %s68
      %s69 = sphi 0, %s66
      %s70 = sphi 0, %s69
      %s86 = sphi 0, %s70
      %s92 = sphi 0, %s94
      %s95 = sphi 0, %s92
      %s96 = sphi 0, %s95
      %s112 = sphi 0, %s96
    $region4: #{tpu_custom_call.1} parent=1 // loop_header_branch
      %17 = sbr.rel (%p15) target = $region8
    $region5: #{tpu_custom_call.1} parent=1 // loop_body
      %s19 = ssub.s32 %s14, 1
      %s20 = ssub.s32 %s14, 2
      %s27 = sadd.s32 1, %s22
      %p28 = scmp.ge.s32.totalorder %s27, 1
      %s29 = scalar_select %p28, 0, %s27
      %s30 = sadd.s32 1, %s21
      %s31 = scalar_select %p28, %s30, %s21
      %p32 = scmp.ge.s32.totalorder %s31, 2
      %s33 = scalar_select %p32, 0, %s31
      %s34 = sadd.s32 %s21, %s22
      %s35 = sadd.s32 %s33, %s29
      %s36 = ssub.s32 %s34, %s35
      %p37 = scmp.eq.s32.totalorder %s36, 0
      %s39 = sadd.s32 %s38, 1
      %s40 = scalar_select %p37, %s38, %s39
      %p43 = pneg %p37
      %p44 = scmp.eq.s32.totalorder %s14, 1
      %p45 = por %p43, %p44
      %p46 = scmp.ne.s32.totalorder %s38, %s41
      %p47 = scmp.eq.s32.totalorder %s14, 0
      %p48 = por %p46, %p47
      %p49 = scmp.ne.s32.totalorder %s38, %s41
      %p50 = scmp.eq.s32.totalorder %s19, 1
      %p51 = por %p49, %p50
      %p52 = scmp.ne.s32.totalorder %s41, %s42
      %p53 = scmp.eq.s32.totalorder %s19, 0
      %p54 = por %p52, %p53
      %p55 = scmp.ne.s32.totalorder %s41, %s42
      %p56 = scmp.eq.s32.totalorder %s20, 1
      %p57 = por %p55, %p56
      %p59 = scmp.ne.s32.totalorder %s42, %s58
      %p60 = scmp.eq.s32.totalorder %s20, 0
      %p61 = por %p59, %p60
      %s62 = sadd.s32 %s21, %s22
      %s63 = sadd.s32 %s33, %s29
      %s64 = ssub.s32 %s62, %s63
      %p65 = scmp.eq.s32.totalorder %s64, 0
      %s67 = sadd.s32 %s66, 1
      %s68 = scalar_select %p65, %s66, %s67
      %p71 = pneg %p65
      %p72 = scmp.eq.s32.totalorder %s14, 1
      %p73 = por %p71, %p72
      %p74 = scmp.ne.s32.totalorder %s66, %s69
      %p75 = scmp.eq.s32.totalorder %s14, 0
      %p76 = por %p74, %p75
      %p77 = scmp.ne.s32.totalorder %s66, %s69
      %p78 = scmp.eq.s32.totalorder %s19, 1
      %p79 = por %p77, %p78
      %p80 = scmp.ne.s32.totalorder %s69, %s70
      %p81 = scmp.eq.s32.totalorder %s19, 0
      %p82 = por %p80, %p81
      %p83 = scmp.ne.s32.totalorder %s69, %s70
      %p84 = scmp.eq.s32.totalorder %s20, 1
      %p85 = por %p83, %p84
      %p87 = scmp.ne.s32.totalorder %s70, %s86
      %p88 = scmp.eq.s32.totalorder %s20, 0
      %p89 = por %p87, %p88
      %s90 = ssub.s32 %s21, %s33
      %p91 = scmp.eq.s32.totalorder %s90, 0
      %s93 = sadd.s32 %s92, 1
      %s94 = scalar_select %p91, %s92, %s93
      %p97 = pneg %p91
      %p98 = scmp.eq.s32.totalorder %s14, 1
      %p99 = por %p97, %p98
      %p100 = scmp.ne.s32.totalorder %s92, %s95
      %p101 = scmp.eq.s32.totalorder %s14, 0
      %p102 = por %p100, %p101
      %p103 = scmp.ne.s32.totalorder %s92, %s95
      %p104 = scmp.eq.s32.totalorder %s19, 1
      %p105 = por %p103, %p104
      %p106 = scmp.ne.s32.totalorder %s95, %s96
      %p107 = scmp.eq.s32.totalorder %s19, 0
      %p108 = por %p106, %p107
      %p109 = scmp.ne.s32.totalorder %s95, %s96
      %p110 = scmp.eq.s32.totalorder %s20, 1
      %p111 = por %p109, %p110
      %p113 = scmp.ne.s32.totalorder %s96, %s112
      %p114 = scmp.eq.s32.totalorder %s20, 0
      %p115 = por %p113, %p114
      %p116 = scmp.le.s32.totalorder 1, %s14
      %p117 = scmp.lt.s32.totalorder %s14, 3
      %p118 = pnand %p116, %p117
      %p119 = pneg %p118
      // Predicated region
      $region9: #{tpu_custom_call.1} parent=5 // pred_check
        _
      $region10: #{tpu_custom_call.1} parent=5 // pred_check_branch
        %121 = sbr.rel (%p118) target = $region12
      $region11: #{tpu_custom_call.1} parent=5 // pred_region
        %s122 = ssub.s32 %s14, 1
      $region12: #{tpu_custom_call.1} parent=5 // pred_fallthru
        _
      %p123 = scmp.lt.s32.totalorder %s14, 2
      // Predicated region
      $region13: #{tpu_custom_call.1} parent=5 // pred_check
        %p124 = pneg %p123
      $region14: #{tpu_custom_call.1} parent=5 // pred_check_branch
        %126 = sbr.rel (%p124) target = $region16
      $region15: #{tpu_custom_call.1} parent=5 // pred_region
        // Predicated region
        $region17: #{tpu_custom_call.1} parent=15 // pred_check
          %p127 = pneg %p48
        $region18: #{tpu_custom_call.1} parent=15 // pred_check_branch
          %129 = sbr.rel (%p127) target = $region20
        $region19: #{tpu_custom_call.1} parent=15 // pred_region
          %s130 = sand.u32 %s38, 1
          %s131 = scalar_lea.sflag [#allocation4], %s130
          %s132 = sand.u32 %s38, 1
          %s133 = smul.addr %s132, 16
          %s134 = scalar_lea.vmem [#allocation3], %s133
          %s135 = sadd.s32 %s21, %s22
          %s136 = smul.u32 16, %s135
          %138 = vsyncadd %s131, 0
          %s139 = scalar_lea.hbm %s0, %s136
          %s141 = sshll.u32 %s139, 4
          %s142 = int_to_ptr.hbm [resolvable:$true] %s141
          %s143 = sshll.u32 %s134, 4
          %s144 = int_to_ptr.vmem [resolvable:$true] %s143
          %146 = dma.hbm_to_vmem [thread:$0]  %s142, 256, %s144, %s131
        $region20: #{tpu_custom_call.1} parent=15 // pred_fallthru
          _
        // Predicated region
        $region21: #{tpu_custom_call.1} parent=15 // pred_check
          %p147 = pneg %p76
        $region22: #{tpu_custom_call.1} parent=15 // pred_check_branch
          %149 = sbr.rel (%p147) target = $region24
        $region23: #{tpu_custom_call.1} parent=15 // pred_region
          %s150 = sand.u32 %s66, 1
          %s151 = scalar_lea.sflag [#allocation6], %s150
          %s152 = sand.u32 %s66, 1
          %s153 = smul.addr %s152, 16
          %s154 = scalar_lea.vmem [#allocation5], %s153
          %s155 = sadd.s32 %s21, %s22
          %s156 = smul.u32 16, %s155
          %158 = vsyncadd %s151, 0
          %s159 = scalar_lea.hbm %s1, %s156
          %s161 = sshll.u32 %s159, 4
          %s162 = int_to_ptr.hbm [resolvable:$true] %s161
          %s163 = sshll.u32 %s154, 4
          %s164 = int_to_ptr.vmem [resolvable:$true] %s163
          %166 = dma.hbm_to_vmem [thread:$0]  %s162, 256, %s164, %s151
        $region24: #{tpu_custom_call.1} parent=15 // pred_fallthru
          _
      $region16: #{tpu_custom_call.1} parent=5 // pred_fallthru
        _
      %p167 = scmp.le.s32.totalorder 1, %s14
      %p168 = scmp.lt.s32.totalorder %s14, 3
      %p169 = pnand %p167, %p168
      %p170 = pneg %p169
      // Predicated region
      $region25: #{tpu_custom_call.1} parent=5 // pred_check
        _
      $region26: #{tpu_custom_call.1} parent=5 // pred_check_branch
        %172 = sbr.rel (%p169) target = $region28
      $region27: #{tpu_custom_call.1} parent=5 // pred_region
        %s173 = ssub.s32 %s14, 1
        %s174 = sand.u32 %s41, 1
        %s175 = scalar_lea.sflag [#allocation4], %s174
        %s176 = sand.u32 %s41, 1
        %s177 = smul.addr %s176, 16
        %s178 = scalar_lea.vmem [#allocation3], %s177
        // Predicated region
        $region29: #{tpu_custom_call.1} parent=27 // pred_check
          %p179 = pneg %p54
        $region30: #{tpu_custom_call.1} parent=27 // pred_check_branch
          %181 = sbr.rel (%p179) target = $region32
        $region31: #{tpu_custom_call.1} parent=27 // pred_region
          %183 = dma.done %s175, 256
        $region32: #{tpu_custom_call.1} parent=27 // pred_fallthru
          _
        %s184 = sand.u32 %s69, 1
        %s185 = scalar_lea.sflag [#allocation6], %s184
        %s186 = sand.u32 %s69, 1
        %s187 = smul.addr %s186, 16
        %s188 = scalar_lea.vmem [#allocation5], %s187
        // Predicated region
        $region33: #{tpu_custom_call.1} parent=27 // pred_check
          %p189 = pneg %p82
        $region34: #{tpu_custom_call.1} parent=27 // pred_check_branch
          %191 = sbr.rel (%p189) target = $region36
        $region35: #{tpu_custom_call.1} parent=27 // pred_region
          %193 = dma.done %s185, 256
        $region36: #{tpu_custom_call.1} parent=27 // pred_fallthru
          _
        %s194 = sand.u32 %s41, 1
        %s195 = scalar_lea.sflag [#allocation4], %s194
        %s196 = sand.u32 %s41, 1
        %s197 = smul.addr %s196, 16
        %s198 = scalar_lea.vmem [#allocation3], %s197
        %p199 = pneg %p54
        %p200 = pneg %p51
        %s201 = sand.u32 %s69, 1
        %s202 = scalar_lea.sflag [#allocation6], %s201
        %s203 = sand.u32 %s69, 1
        %s204 = smul.addr %s203, 16
        %s205 = scalar_lea.vmem [#allocation5], %s204
        %p206 = pneg %p82
        %p207 = pneg %p79
        %p208 = pneg %p108
        %p209 = pneg %p105
        %p210 = scmp.lt.s32.totalorder %s23, 1
        %s211 = scalar_select %p210, %s23, 1
        %s212 = smul.addr %s211, 8
        %s213 = scalar_lea.vmem %s2, %s212
        %s214 = sadd.s32 %s23, %s24
        %s215 = smul.u32 16, %s214
        %s216 = sadd.s32 %s23, %s24
        %s217 = smul.u32 16, %s216
        %p218 = scmp.lt.s32.totalorder %s23, 1
        %s219 = scalar_select %p218, %s23, 1
        %s220 = smul.addr %s219, 8
        %s221 = scalar_lea.vmem %s2, %s220
        %p222 = scmp.eq.s32.totalorder %s24, 0
        // Predicated region
        $region37: #{tpu_custom_call.1} parent=27 // pred_check
          %p223 = pneg %p222
        $region38: #{tpu_custom_call.1} parent=27 // pred_check_branch
          %225 = sbr.rel (%p223) target = $region40
        $region39: #{tpu_custom_call.1} parent=27 // pred_region
          %vm226 = vcmask 7168
          %227 = vst.msk [vmem:[%s221] sm:$0xff] %vm226, 0.0
          %v228 = vlaneseq
          %v229 = vshrl.u32 %v228, 7
          %230 = vst [vmem:[#allocation2] sm:$0xff] %v229
          %231 = vst [vmem:[#allocation2 + $0x8] sm:$0xff] %v229
          %232 = vst [vmem:[#allocation2 + $0x10] sm:$0xff] %v229
          %233 = vst [vmem:[#allocation2 + $0x18] sm:$0xff] %v229
          %234 = vst [vmem:[#allocation2 + $0x20] sm:$0xff] %v229
          %235 = vst [vmem:[#allocation2 + $0x28] sm:$0xff] %v229
          %236 = vst [vmem:[#allocation2 + $0x30] sm:$0xff] %v229
          %237 = vst [vmem:[#allocation2 + $0x38] sm:$0xff] %v229
          %238 = vst [vmem:[#allocation2 + $0x40] sm:$0xff] %v229
          %239 = vst [vmem:[#allocation2 + $0x48] sm:$0xff] %v229
          %240 = vst [vmem:[#allocation2 + $0x50] sm:$0xff] %v229
          %241 = vst [vmem:[#allocation2 + $0x58] sm:$0xff] %v229
          %242 = vst [vmem:[#allocation2 + $0x60] sm:$0xff] %v229
          %243 = vst [vmem:[#allocation2 + $0x68] sm:$0xff] %v229
          %244 = vst [vmem:[#allocation2 + $0x70] sm:$0xff] %v229
          %245 = vst [vmem:[#allocation2 + $0x78] sm:$0xff] %v229
        $region40: #{tpu_custom_call.1} parent=27 // pred_fallthru
          _
        %v246 = vld [vmem:[%s178] sm:$0xff]
        %v247 = vld [vmem:[%s178 + $0x8] sm:$0xff]
        %v248 = vld [vmem:[#allocation2] sm:$0xff]
        %v249 = vld [vmem:[#allocation2 + $0x8] sm:$0xff]
        %v250 = vld [vmem:[#allocation2 + $0x10] sm:$0xff]
        %v251 = vld [vmem:[#allocation2 + $0x18] sm:$0xff]
        %v252 = vld [vmem:[#allocation2 + $0x20] sm:$0xff]
        %v253 = vld [vmem:[#allocation2 + $0x28] sm:$0xff]
        %v254 = vld [vmem:[#allocation2 + $0x30] sm:$0xff]
        %v255 = vld [vmem:[#allocation2 + $0x38] sm:$0xff]
        %v256 = vld [vmem:[#allocation2 + $0x40] sm:$0xff]
        %v257 = vld [vmem:[#allocation2 + $0x48] sm:$0xff]
        %v258 = vld [vmem:[#allocation2 + $0x50] sm:$0xff]
        %v259 = vld [vmem:[#allocation2 + $0x58] sm:$0xff]
        %v260 = vld [vmem:[#allocation2 + $0x60] sm:$0xff]
        %v261 = vld [vmem:[#allocation2 + $0x68] sm:$0xff]
        %v262 = vld [vmem:[#allocation2 + $0x70] sm:$0xff]
        %v263 = vld [vmem:[#allocation2 + $0x78] sm:$0xff]
        %v264 = vperm.slane %v246, 0
        %v265 = vperm.slane %v246, 1
        %v266 = vperm.slane %v246, 2
        %v267 = vperm.slane %v246, 3
        %v268 = vperm.slane %v246, 4
        %v269 = vperm.slane %v246, 5
        %v270 = vperm.slane %v246, 6
        %v271 = vperm.slane %v246, 7
        %v272 = vperm.slane %v247, 0
        %v273 = vperm.slane %v247, 1
        %v274 = vperm.slane %v247, 2
        %v275 = vperm.slane %v247, 3
        %v276 = vperm.slane %v247, 4
        %v277 = vperm.slane %v247, 5
        %v278 = vperm.slane %v247, 6
        %v279 = vperm.slane %v247, 7
        %vm280 = vcmp.eq.s32.totalorder %v264, %v248
        %vm281 = vcmp.eq.s32.totalorder %v265, %v249
        %vm282 = vcmp.eq.s32.totalorder %v266, %v250
        %vm283 = vcmp.eq.s32.totalorder %v267, %v251
        %vm284 = vcmp.eq.s32.totalorder %v268, %v252
        %vm285 = vcmp.eq.s32.totalorder %v269, %v253
        %vm286 = vcmp.eq.s32.totalorder %v270, %v254
        %vm287 = vcmp.eq.s32.totalorder %v271, %v255
        %vm288 = vcmp.eq.s32.totalorder %v272, %v256
        %vm289 = vcmp.eq.s32.totalorder %v273, %v257
        %vm290 = vcmp.eq.s32.totalorder %v274, %v258
        %vm291 = vcmp.eq.s32.totalorder %v275, %v259
        %vm292 = vcmp.eq.s32.totalorder %v276, %v260
        %vm293 = vcmp.eq.s32.totalorder %v277, %v261
        %vm294 = vcmp.eq.s32.totalorder %v278, %v262
        %vm295 = vcmp.eq.s32.totalorder %v279, %v263
        %v296 = vld [vmem:[%s188] sm:$0xff]
        %v297 = vld [vmem:[%s188 + $0x8] sm:$0xff]
        %v300 = vperm.slane %v296, 0
        %v301 = vperm.slane %v296, 1
        %v302 = vperm.slane %v296, 2
        %v303 = vperm.slane %v296, 3
        %v304 = vperm.slane %v296, 4
        %v305 = vperm.slane %v296, 5
        %v306 = vperm.slane %v296, 6
        %v307 = vperm.slane %v296, 7
        %v308 = vperm.slane %v297, 0
        %v309 = vperm.slane %v297, 1
        %v310 = vperm.slane %v297, 2
        %v311 = vperm.slane %v297, 3
        %v312 = vperm.slane %v297, 4
        %v313 = vperm.slane %v297, 5
        %v314 = vperm.slane %v297, 6
        %v315 = vperm.slane %v297, 7
        %v332 = vsel %vm280, %v300, 0.0
        %v333 = vsel %vm281, %v301, 0.0
        %v334 = vsel %vm282, %v302, 0.0
        %v335 = vsel %vm283, %v303, 0.0
        %v336 = vsel %vm284, %v304, 0.0
        %v337 = vsel %vm285, %v305, 0.0
        %v338 = vsel %vm286, %v306, 0.0
        %v339 = vsel %vm287, %v307, 0.0
        %v340 = vsel %vm288, %v308, 0.0
        %v341 = vsel %vm289, %v309, 0.0
        %v342 = vsel %vm290, %v310, 0.0
        %v343 = vsel %vm291, %v311, 0.0
        %v344 = vsel %vm292, %v312, 0.0
        %v345 = vsel %vm293, %v313, 0.0
        %v346 = vsel %vm294, %v314, 0.0
        %v347 = vsel %vm295, %v315, 0.0
        %v348 = vld [vmem:[%s221] sm:$0xff]
        %v349 = vadd.f32 %v332, %v333
        %v350 = vadd.f32 %v349, %v334
        %v351 = vadd.f32 %v350, %v335
        %v352 = vadd.f32 %v351, %v336
        %v353 = vadd.f32 %v352, %v337
        %v354 = vadd.f32 %v353, %v338
        %v355 = vadd.f32 %v354, %v339
        %v356 = vadd.f32 %v355, %v340
        %v357 = vadd.f32 %v356, %v341
        %v358 = vadd.f32 %v357, %v342
        %v359 = vadd.f32 %v358, %v343
        %v360 = vadd.f32 %v359, %v344
        %v361 = vadd.f32 %v360, %v345
        %v362 = vadd.f32 %v361, %v346
        %v363 = vadd.f32 %v362, %v347
        %364 = vadd.xlane.f32.xlu0 %v363
        %v365 = vpop.xlane.xlu0 %364
        %v366 = vadd.f32 %v348, %v365
        %vm367 = vcmask 7168
        %368 = vst.msk [vmem:[%s221] sm:$0xff] %vm367, %v366
        %p369 = scmp.lt.s32.totalorder %s23, 1
        %s370 = scalar_select %p369, %s23, 1
        %s371 = smul.addr %s370, 8
        %s372 = scalar_lea.vmem %s2, %s371
        // Predicated region
        $region41: #{tpu_custom_call.1} parent=27 // pred_check
          %p373 = pneg %p105
        $region42: #{tpu_custom_call.1} parent=27 // pred_check_branch
          %375 = sbr.rel (%p373) target = $region44
        $region43: #{tpu_custom_call.1} parent=27 // pred_region
          _
        $region44: #{tpu_custom_call.1} parent=27 // pred_fallthru
          _
      $region28: #{tpu_custom_call.1} parent=5 // pred_fallthru
        _
      %p376 = scmp.le.s32.totalorder 2, %s14
      // Predicated region
      $region45: #{tpu_custom_call.1} parent=5 // pred_check
        %p377 = pneg %p376
      $region46: #{tpu_custom_call.1} parent=5 // pred_check_branch
        %379 = sbr.rel (%p377) target = $region48
      $region47: #{tpu_custom_call.1} parent=5 // pred_region
        %s380 = ssub.s32 %s14, 2
        // Predicated region
        $region49: #{tpu_custom_call.1} parent=47 // pred_check
          %p381 = pneg %p111
        $region50: #{tpu_custom_call.1} parent=47 // pred_check_branch
          %383 = sbr.rel (%p381) target = $region52
        $region51: #{tpu_custom_call.1} parent=47 // pred_region
          %p384 = scmp.lt.s32.totalorder %s25, 1
          %s385 = scalar_select %p384, %s25, 1
          %s386 = smul.addr %s385, 8
          %s387 = scalar_lea.vmem %s2, %s386
        $region52: #{tpu_custom_call.1} parent=47 // pred_fallthru
          _
      $region48: #{tpu_custom_call.1} parent=5 // pred_fallthru
        _
    $region6: #{tpu_custom_call.1} parent=1 // loop_footer
      %s18 = sadd.s32 1, %s14
    $region7: #{tpu_custom_call.1} parent=1 // loop_footer_branch
      %13 = sbr.rel target = $region3
    $region8: #{tpu_custom_call.1} parent=1 // loop_exit
      _
    %388 = vsyncpa [#allocation4], 1
    %s389 = scalar_lea.sflag [#allocation4], 1
    %390 = vsyncpa %s389, 1
    %391 = vsyncpa [#allocation6], 1
    %s392 = scalar_lea.sflag [#allocation6], 1
    %393 = vsyncpa %s392, 1

</llo_original>
